<compile_context>
chip_gen: v7x
topology: tpu7x:2x2x1
jax: 0.10.0
libtpu: 0.0.40
codegen_flags: <defaults>
</compile_context>

<pallas_src>
import functools

import jax
import jax.numpy as jnp
from jax.experimental import pallas as pl
from jax.experimental.pallas import tpu as pltpu


def _npair_kernel(feat_ref, right_ref, wrong_ref, bwrong_ref, part_ref, *,
                  inv_beta: float, tb: int, d: int, nw: int, nbw: int,
                  batch_size: int):
    pid = pl.program_id(0)

    feat = feat_ref[...].astype(jnp.float32)      # (tb, D)
    right = right_ref[...].astype(jnp.float32)    # (tb, D)

    # Rows of a ragged last tile are undefined -> per-row SELECT masks.
    row = jax.lax.broadcasted_iota(jnp.int32, (tb, 1), 0) + pid * tb
    valid = row < batch_size                      # (tb, 1)

    right_dis = jnp.sum(right * feat, axis=-1, keepdims=True)          # (tb, 1)
    ss_feat = jnp.sum(jnp.where(
        valid, jnp.sum(feat * feat, axis=-1, keepdims=True), 0.0))
    ss_right = jnp.sum(jnp.where(
        valid, jnp.sum(right * right, axis=-1, keepdims=True), 0.0))

    def group(ref, n):
        # ref block: (tb, n*D), lane-dense.  Static lane slices are row-aligned
        # with feat, so no feat repeat / sublane relayout on the big tensors.
        score = jnp.zeros((tb, 1), jnp.float32)
        ssq = jnp.zeros((tb, 1), jnp.float32)
        for j in range(n):                         # static, unrolled at trace
            xj = ref[:, j * d:(j + 1) * d].astype(jnp.float32)   # (tb, D)
            ssq = ssq + jnp.sum(xj * xj, axis=-1, keepdims=True)
            dot = jnp.sum(xj * feat, axis=-1, keepdims=True)
            score = score + jnp.exp((dot - right_dis) * inv_beta)
        return score, ssq

    score_w, ssq_w = group(wrong_ref, nw)
    score_bw, ssq_bw = group(bwrong_ref, nbw)

    log_term = jnp.where(valid, jnp.log(score_w + score_bw + 1.0), 0.0)
    loss_dis = jnp.sum(log_term)
    ss_wrong = jnp.sum(jnp.where(valid, ssq_w, 0.0))
    ss_bwrong = jnp.sum(jnp.where(valid, ssq_bw, 0.0))

    # Lane-dense (8, 128) per-tile partial-sum slab: sublane r holds partial r.
    ridx = jax.lax.broadcasted_iota(jnp.int32, (8, 128), 0)
    slab = jnp.where(ridx == 0, loss_dis, 0.0)
    slab = jnp.where(ridx == 1, ss_right, slab)
    slab = jnp.where(ridx == 2, ss_feat, slab)
    slab = jnp.where(ridx == 3, ss_wrong, slab)
    slab = jnp.where(ridx == 4, ss_bwrong, slab)
    part_ref[0] = slab


def _choose_tile(batch: int, nw: int, nbw: int, d: int, itemsize: int,
                 tb: int | None):
    # Sublane granule matching the packed layout of the input dtype.
    granule = {4: 8, 2: 16, 1: 32}.get(itemsize, 8)
    try:
        info = pltpu.get_tpu_info()
        vmem_cap = int(getattr(info, "vmem_capacity_bytes", 0)) or (64 << 20)
    except Exception:
        vmem_cap = 64 << 20                        # v7x-safe fallback
    vmem_limit = min(vmem_cap - (16 << 20), 100 << 20)
    budget = (vmem_limit * 3) // 4                 # headroom for compiler scratch

    # Honest per-batch-row VMEM: double-buffered input blocks + f32 temporaries.
    row_bytes = 2 * (2 + nw + nbw) * d * itemsize + 8 * d * 4
    if tb is None:
        tb = max(granule, (budget // max(row_bytes, 1)) // granule * granule)
    else:
        tb = max(granule, (int(tb) // granule) * granule)
    if tb >= batch:
        tb = batch                                 # single full-extent tile
    return tb, int(vmem_limit)


def npair_loss(feat: jax.Array, right: jax.Array, wrong: jax.Array,
               batch_wrong: jax.Array, *, beta: float,
               tb: int | None = None) -> jax.Array:
    """N-pair loss. feat/right: (B, D); wrong: (B, NW, D); batch_wrong: (B, NBW, D)."""
    assert feat.ndim == 2 and right.shape == feat.shape
    assert wrong.ndim == 3 and batch_wrong.ndim == 3
    B, D = feat.shape
    NW, NBW = wrong.shape[1], batch_wrong.shape[1]
    assert wrong.shape == (B, NW, D) and batch_wrong.shape == (B, NBW, D)

    # Free, contiguous collapse: big tensors become lane-dense (B, N*D).
    wrong2 = wrong.reshape(B, NW * D)
    bwrong2 = batch_wrong.reshape(B, NBW * D)

    itemsize = jnp.dtype(feat.dtype).itemsize
    tb, vmem_limit = _choose_tile(B, NW, NBW, D, itemsize, tb)
    num_tiles = (B + tb - 1) // tb

    kernel = functools.partial(
        _npair_kernel, inv_beta=1.0 / float(beta),
        tb=tb, d=D, nw=NW, nbw=NBW, batch_size=B)

    in_bytes = (feat.size + right.size + wrong.size + batch_wrong.size) * itemsize
    cost = pl.CostEstimate(
        flops=int(4 * B * (NW + NBW + 2) * D),
        transcendentals=int(B * (NW + NBW + 1)),
        bytes_accessed=int(in_bytes + num_tiles * 8 * 128 * 4))

    parts = pl.pallas_call(
        kernel,
        out_shape=jax.ShapeDtypeStruct((num_tiles, 8, 128), jnp.float32),
        grid_spec=pltpu.PrefetchScalarGridSpec(
            num_scalar_prefetch=0,
            grid=(num_tiles,),
            in_specs=[
                pl.BlockSpec((tb, D), lambda i: (i, 0)),
                pl.BlockSpec((tb, D), lambda i: (i, 0)),
                pl.BlockSpec((tb, NW * D), lambda i: (i, 0)),
                pl.BlockSpec((tb, NBW * D), lambda i: (i, 0)),
            ],
            out_specs=pl.BlockSpec((1, 8, 128), lambda i: (i, 0, 0)),
        ),
        compiler_params=pltpu.CompilerParams(
            dimension_semantics=("parallel",),
            vmem_limit_bytes=vmem_limit),
        cost_estimate=cost,
    )(feat, right, wrong2, bwrong2)

    # Tiny epilogue in plain JAX (tree-reduce over per-tile partials).
    sums = jnp.sum(parts[:, :5, 0], axis=0)        # (5,)
    loss_norm = (jnp.sqrt(sums[1]) + jnp.sqrt(sums[2])
                 + jnp.sqrt(sums[3]) + jnp.sqrt(sums[4]))
    return (sums[0] + 0.1 * loss_norm) / B


if __name__ == "__main__":
    B, ninp, NW, NBW = 10, 128, 3, 5
    beta = 0.5   # margin is stored as log(margin) by the module but unused in forward

    key = jax.random.PRNGKey(0)
    kf, kr, kw, kb = jax.random.split(key, 4)
    feat = 0.1 * jax.random.normal(kf, (B, ninp), dtype=jnp.float32)
    right = 0.1 * jax.random.normal(kr, (B, ninp), dtype=jnp.float32)
    wrong = 0.1 * jax.random.normal(kw, (B, NW, ninp), dtype=jnp.float32)
    batch_wrong = 0.1 * jax.random.normal(kb, (B, NBW, ninp), dtype=jnp.float32)

    # Pure-JAX reference (same math as the PyTorch module).
    right_dis = jnp.sum(right * feat, axis=-1, keepdims=True)           # (B, 1)
    wrong_dis = jnp.einsum("bwd,bd->bw", wrong, feat)                   # (B, NW)
    bwrong_dis = jnp.einsum("bwd,bd->bw", batch_wrong, feat)            # (B, NBW)
    wrong_score = (jnp.sum(jnp.exp((wrong_dis - right_dis) / beta), axis=1)
                   + jnp.sum(jnp.exp((bwrong_dis - right_dis) / beta), axis=1))
    loss_dis = jnp.sum(jnp.log(wrong_score + 1.0))
    loss_norm = (jnp.linalg.norm(right) + jnp.linalg.norm(feat)
                 + jnp.linalg.norm(wrong) + jnp.linalg.norm(batch_wrong))
    ref = (loss_dis + 0.1 * loss_norm) / B

    # Auto tile (single full-batch tile here) and a forced small tile that
    # exercises the multi-tile grid + ragged-last-tile masking path.
    loss_auto = npair_loss(feat, right, wrong, batch_wrong, beta=beta)
    loss_tiled = npair_loss(feat, right, wrong, batch_wrong, beta=beta, tb=8)
    jax.block_until_ready((loss_auto, loss_tiled))

    assert jnp.allclose(loss_auto, ref, rtol=1e-5, atol=1e-5), (loss_auto, ref)
    assert jnp.allclose(loss_tiled, ref, rtol=1e-5, atol=1e-5), (loss_tiled, ref)
    print("KERNEL_OK")
</pallas_src>

<mosaic_0001>
module attributes {stable_mosaic.version = 11 : i64} {
  func.func @_npair_kernel(%arg0: i32, %arg1: memref<10x128xf32, #tpu.memory_space<vmem>>, %arg2: memref<10x128xf32, #tpu.memory_space<vmem>>, %arg3: memref<10x384xf32, #tpu.memory_space<vmem>>, %arg4: memref<10x640xf32, #tpu.memory_space<vmem>>, %arg5: memref<1x8x128xf32, #tpu.memory_space<vmem>>) attributes {dimension_semantics = [#tpu.dimension_semantics<parallel>], iteration_bounds = array<i64: 1>, scalar_prefetch = 0 : i64, scratch_operands = 0 : i64, tpu.core_type = #tpu.core_type<tc>, window_params = [{transform_indices = @transform_0, window_bounds = array<i64: 10, 128>}, {transform_indices = @transform_1, window_bounds = array<i64: 10, 128>}, {transform_indices = @transform_2, window_bounds = array<i64: 10, 384>}, {transform_indices = @transform_3, window_bounds = array<i64: 10, 640>}, {transform_indices = @transform_4, window_bounds = array<i64: 1, 8, 128>}]} {
    %c0 = arith.constant 0 : index
    %c0_0 = arith.constant 0 : index
    %0 = vector.load %arg1[%c0, %c0_0] : memref<10x128xf32, #tpu.memory_space<vmem>>, vector<10x128xf32>
    %c0_1 = arith.constant 0 : index
    %c0_2 = arith.constant 0 : index
    %1 = vector.load %arg2[%c0_1, %c0_2] : memref<10x128xf32, #tpu.memory_space<vmem>>, vector<10x128xf32>
    %2 = tpu.iota {dimensions = array<i32: 0>} : vector<10x1xi32>
    %c10_i32 = arith.constant 10 : i32
    %3 = arith.muli %arg0, %c10_i32 : i32
    %4 = vector.broadcast %3 : i32 to vector<10x1xi32>
    %5 = arith.addi %2, %4 : vector<10x1xi32>
    %c10_i32_3 = arith.constant 10 : i32
    %6 = vector.broadcast %c10_i32_3 : i32 to vector<10x1xi32>
    %7 = arith.cmpi slt, %5, %6 : vector<10x1xi32>
    %8 = arith.mulf %1, %0 : vector<10x128xf32>
    %cst = arith.constant dense<0.000000e+00> : vector<10xf32>
    %9 = vector.multi_reduction <add>, %8, %cst [1] : vector<10x128xf32> to vector<10xf32>
    %10 = vector.shape_cast %9 : vector<10xf32> to vector<10x1xf32>
    %11 = arith.mulf %0, %0 : vector<10x128xf32>
    %cst_4 = arith.constant dense<0.000000e+00> : vector<10xf32>
    %12 = vector.multi_reduction <add>, %11, %cst_4 [1] : vector<10x128xf32> to vector<10xf32>
    %13 = vector.shape_cast %12 : vector<10xf32> to vector<10x1xf32>
    %cst_5 = arith.constant 0.000000e+00 : f32
    %14 = vector.broadcast %cst_5 : f32 to vector<10x1xf32>
    %15 = arith.select %7, %13, %14 : vector<10x1xi1>, vector<10x1xf32>
    %16 = vector.shape_cast %15 : vector<10x1xf32> to vector<1x10x1xf32>
    %cst_6 = arith.constant dense<0.000000e+00> : vector<1xf32>
    %17 = vector.multi_reduction <add>, %16, %cst_6 [1, 2] : vector<1x10x1xf32> to vector<1xf32>
    %18 = vector.shape_cast %17 : vector<1xf32> to vector<1x1x1xf32>
    %19 = vector.extract %18[0, 0, 0] : f32 from vector<1x1x1xf32>
    %20 = arith.mulf %1, %1 : vector<10x128xf32>
    %cst_7 = arith.constant dense<0.000000e+00> : vector<10xf32>
    %21 = vector.multi_reduction <add>, %20, %cst_7 [1] : vector<10x128xf32> to vector<10xf32>
    %22 = vector.shape_cast %21 : vector<10xf32> to vector<10x1xf32>
    %cst_8 = arith.constant 0.000000e+00 : f32
    %23 = vector.broadcast %cst_8 : f32 to vector<10x1xf32>
    %24 = arith.select %7, %22, %23 : vector<10x1xi1>, vector<10x1xf32>
    %25 = vector.shape_cast %24 : vector<10x1xf32> to vector<1x10x1xf32>
    %cst_9 = arith.constant dense<0.000000e+00> : vector<1xf32>
    %26 = vector.multi_reduction <add>, %25, %cst_9 [1, 2] : vector<1x10x1xf32> to vector<1xf32>
    %27 = vector.shape_cast %26 : vector<1xf32> to vector<1x1x1xf32>
    %28 = vector.extract %27[0, 0, 0] : f32 from vector<1x1x1xf32>
    %cst_10 = arith.constant 0.000000e+00 : f32
    %29 = vector.broadcast %cst_10 : f32 to vector<10x1xf32>
    %cst_11 = arith.constant 0.000000e+00 : f32
    %30 = vector.broadcast %cst_11 : f32 to vector<10x1xf32>
    %c0_12 = arith.constant 0 : index
    %c0_13 = arith.constant 0 : index
    %31 = vector.load %arg3[%c0_12, %c0_13] : memref<10x384xf32, #tpu.memory_space<vmem>>, vector<10x128xf32>
    %32 = arith.mulf %31, %31 : vector<10x128xf32>
    %cst_14 = arith.constant dense<0.000000e+00> : vector<10xf32>
    %33 = vector.multi_reduction <add>, %32, %cst_14 [1] : vector<10x128xf32> to vector<10xf32>
    %34 = vector.shape_cast %33 : vector<10xf32> to vector<10x1xf32>
    %35 = arith.addf %30, %34 : vector<10x1xf32>
    %36 = arith.mulf %31, %0 : vector<10x128xf32>
    %cst_15 = arith.constant dense<0.000000e+00> : vector<10xf32>
    %37 = vector.multi_reduction <add>, %36, %cst_15 [1] : vector<10x128xf32> to vector<10xf32>
    %38 = vector.shape_cast %37 : vector<10xf32> to vector<10x1xf32>
    %39 = arith.subf %38, %10 : vector<10x1xf32>
    %cst_16 = arith.constant 2.000000e+00 : f32
    %40 = vector.broadcast %cst_16 : f32 to vector<10x1xf32>
    %41 = arith.mulf %39, %40 : vector<10x1xf32>
    %42 = math.exp %41 : vector<10x1xf32>
    %43 = arith.addf %29, %42 : vector<10x1xf32>
    %c0_17 = arith.constant 0 : index
    %c128 = arith.constant 128 : index
    %44 = vector.load %arg3[%c0_17, %c128] : memref<10x384xf32, #tpu.memory_space<vmem>>, vector<10x128xf32>
    %45 = arith.mulf %44, %44 : vector<10x128xf32>
    %cst_18 = arith.constant dense<0.000000e+00> : vector<10xf32>
    %46 = vector.multi_reduction <add>, %45, %cst_18 [1] : vector<10x128xf32> to vector<10xf32>
    %47 = vector.shape_cast %46 : vector<10xf32> to vector<10x1xf32>
    %48 = arith.addf %35, %47 : vector<10x1xf32>
    %49 = arith.mulf %44, %0 : vector<10x128xf32>
    %cst_19 = arith.constant dense<0.000000e+00> : vector<10xf32>
    %50 = vector.multi_reduction <add>, %49, %cst_19 [1] : vector<10x128xf32> to vector<10xf32>
    %51 = vector.shape_cast %50 : vector<10xf32> to vector<10x1xf32>
    %52 = arith.subf %51, %10 : vector<10x1xf32>
    %cst_20 = arith.constant 2.000000e+00 : f32
    %53 = vector.broadcast %cst_20 : f32 to vector<10x1xf32>
    %54 = arith.mulf %52, %53 : vector<10x1xf32>
    %55 = math.exp %54 : vector<10x1xf32>
    %56 = arith.addf %43, %55 : vector<10x1xf32>
    %c0_21 = arith.constant 0 : index
    %c256 = arith.constant 256 : index
    %57 = vector.load %arg3[%c0_21, %c256] : memref<10x384xf32, #tpu.memory_space<vmem>>, vector<10x128xf32>
    %58 = arith.mulf %57, %57 : vector<10x128xf32>
    %cst_22 = arith.constant dense<0.000000e+00> : vector<10xf32>
    %59 = vector.multi_reduction <add>, %58, %cst_22 [1] : vector<10x128xf32> to vector<10xf32>
    %60 = vector.shape_cast %59 : vector<10xf32> to vector<10x1xf32>
    %61 = arith.addf %48, %60 : vector<10x1xf32>
    %62 = arith.mulf %57, %0 : vector<10x128xf32>
    %cst_23 = arith.constant dense<0.000000e+00> : vector<10xf32>
    %63 = vector.multi_reduction <add>, %62, %cst_23 [1] : vector<10x128xf32> to vector<10xf32>
    %64 = vector.shape_cast %63 : vector<10xf32> to vector<10x1xf32>
    %65 = arith.subf %64, %10 : vector<10x1xf32>
    %cst_24 = arith.constant 2.000000e+00 : f32
    %66 = vector.broadcast %cst_24 : f32 to vector<10x1xf32>
    %67 = arith.mulf %65, %66 : vector<10x1xf32>
    %68 = math.exp %67 : vector<10x1xf32>
    %69 = arith.addf %56, %68 : vector<10x1xf32>
    %cst_25 = arith.constant 0.000000e+00 : f32
    %70 = vector.broadcast %cst_25 : f32 to vector<10x1xf32>
    %cst_26 = arith.constant 0.000000e+00 : f32
    %71 = vector.broadcast %cst_26 : f32 to vector<10x1xf32>
    %c0_27 = arith.constant 0 : index
    %c0_28 = arith.constant 0 : index
    %72 = vector.load %arg4[%c0_27, %c0_28] : memref<10x640xf32, #tpu.memory_space<vmem>>, vector<10x128xf32>
    %73 = arith.mulf %72, %72 : vector<10x128xf32>
    %cst_29 = arith.constant dense<0.000000e+00> : vector<10xf32>
    %74 = vector.multi_reduction <add>, %73, %cst_29 [1] : vector<10x128xf32> to vector<10xf32>
    %75 = vector.shape_cast %74 : vector<10xf32> to vector<10x1xf32>
    %76 = arith.addf %71, %75 : vector<10x1xf32>
    %77 = arith.mulf %72, %0 : vector<10x128xf32>
    %cst_30 = arith.constant dense<0.000000e+00> : vector<10xf32>
    %78 = vector.multi_reduction <add>, %77, %cst_30 [1] : vector<10x128xf32> to vector<10xf32>
    %79 = vector.shape_cast %78 : vector<10xf32> to vector<10x1xf32>
    %80 = arith.subf %79, %10 : vector<10x1xf32>
    %cst_31 = arith.constant 2.000000e+00 : f32
    %81 = vector.broadcast %cst_31 : f32 to vector<10x1xf32>
    %82 = arith.mulf %80, %81 : vector<10x1xf32>
    %83 = math.exp %82 : vector<10x1xf32>
    %84 = arith.addf %70, %83 : vector<10x1xf32>
    %c0_32 = arith.constant 0 : index
    %c128_33 = arith.constant 128 : index
    %85 = vector.load %arg4[%c0_32, %c128_33] : memref<10x640xf32, #tpu.memory_space<vmem>>, vector<10x128xf32>
    %86 = arith.mulf %85, %85 : vector<10x128xf32>
    %cst_34 = arith.constant dense<0.000000e+00> : vector<10xf32>
    %87 = vector.multi_reduction <add>, %86, %cst_34 [1] : vector<10x128xf32> to vector<10xf32>
    %88 = vector.shape_cast %87 : vector<10xf32> to vector<10x1xf32>
    %89 = arith.addf %76, %88 : vector<10x1xf32>
    %90 = arith.mulf %85, %0 : vector<10x128xf32>
    %cst_35 = arith.constant dense<0.000000e+00> : vector<10xf32>
    %91 = vector.multi_reduction <add>, %90, %cst_35 [1] : vector<10x128xf32> to vector<10xf32>
    %92 = vector.shape_cast %91 : vector<10xf32> to vector<10x1xf32>
    %93 = arith.subf %92, %10 : vector<10x1xf32>
    %cst_36 = arith.constant 2.000000e+00 : f32
    %94 = vector.broadcast %cst_36 : f32 to vector<10x1xf32>
    %95 = arith.mulf %93, %94 : vector<10x1xf32>
    %96 = math.exp %95 : vector<10x1xf32>
    %97 = arith.addf %84, %96 : vector<10x1xf32>
    %c0_37 = arith.constant 0 : index
    %c256_38 = arith.constant 256 : index
    %98 = vector.load %arg4[%c0_37, %c256_38] : memref<10x640xf32, #tpu.memory_space<vmem>>, vector<10x128xf32>
    %99 = arith.mulf %98, %98 : vector<10x128xf32>
    %cst_39 = arith.constant dense<0.000000e+00> : vector<10xf32>
    %100 = vector.multi_reduction <add>, %99, %cst_39 [1] : vector<10x128xf32> to vector<10xf32>
    %101 = vector.shape_cast %100 : vector<10xf32> to vector<10x1xf32>
    %102 = arith.addf %89, %101 : vector<10x1xf32>
    %103 = arith.mulf %98, %0 : vector<10x128xf32>
    %cst_40 = arith.constant dense<0.000000e+00> : vector<10xf32>
    %104 = vector.multi_reduction <add>, %103, %cst_40 [1] : vector<10x128xf32> to vector<10xf32>
    %105 = vector.shape_cast %104 : vector<10xf32> to vector<10x1xf32>
    %106 = arith.subf %105, %10 : vector<10x1xf32>
    %cst_41 = arith.constant 2.000000e+00 : f32
    %107 = vector.broadcast %cst_41 : f32 to vector<10x1xf32>
    %108 = arith.mulf %106, %107 : vector<10x1xf32>
    %109 = math.exp %108 : vector<10x1xf32>
    %110 = arith.addf %97, %109 : vector<10x1xf32>
    %c0_42 = arith.constant 0 : index
    %c384 = arith.constant 384 : index
    %111 = vector.load %arg4[%c0_42, %c384] : memref<10x640xf32, #tpu.memory_space<vmem>>, vector<10x128xf32>
    %112 = arith.mulf %111, %111 : vector<10x128xf32>
    %cst_43 = arith.constant dense<0.000000e+00> : vector<10xf32>
    %113 = vector.multi_reduction <add>, %112, %cst_43 [1] : vector<10x128xf32> to vector<10xf32>
    %114 = vector.shape_cast %113 : vector<10xf32> to vector<10x1xf32>
    %115 = arith.addf %102, %114 : vector<10x1xf32>
    %116 = arith.mulf %111, %0 : vector<10x128xf32>
    %cst_44 = arith.constant dense<0.000000e+00> : vector<10xf32>
    %117 = vector.multi_reduction <add>, %116, %cst_44 [1] : vector<10x128xf32> to vector<10xf32>
    %118 = vector.shape_cast %117 : vector<10xf32> to vector<10x1xf32>
    %119 = arith.subf %118, %10 : vector<10x1xf32>
    %cst_45 = arith.constant 2.000000e+00 : f32
    %120 = vector.broadcast %cst_45 : f32 to vector<10x1xf32>
    %121 = arith.mulf %119, %120 : vector<10x1xf32>
    %122 = math.exp %121 : vector<10x1xf32>
    %123 = arith.addf %110, %122 : vector<10x1xf32>
    %c0_46 = arith.constant 0 : index
    %c512 = arith.constant 512 : index
    %124 = vector.load %arg4[%c0_46, %c512] : memref<10x640xf32, #tpu.memory_space<vmem>>, vector<10x128xf32>
    %125 = arith.mulf %124, %124 : vector<10x128xf32>
    %cst_47 = arith.constant dense<0.000000e+00> : vector<10xf32>
    %126 = vector.multi_reduction <add>, %125, %cst_47 [1] : vector<10x128xf32> to vector<10xf32>
    %127 = vector.shape_cast %126 : vector<10xf32> to vector<10x1xf32>
    %128 = arith.addf %115, %127 : vector<10x1xf32>
    %129 = arith.mulf %124, %0 : vector<10x128xf32>
    %cst_48 = arith.constant dense<0.000000e+00> : vector<10xf32>
    %130 = vector.multi_reduction <add>, %129, %cst_48 [1] : vector<10x128xf32> to vector<10xf32>
    %131 = vector.shape_cast %130 : vector<10xf32> to vector<10x1xf32>
    %132 = arith.subf %131, %10 : vector<10x1xf32>
    %cst_49 = arith.constant 2.000000e+00 : f32
    %133 = vector.broadcast %cst_49 : f32 to vector<10x1xf32>
    %134 = arith.mulf %132, %133 : vector<10x1xf32>
    %135 = math.exp %134 : vector<10x1xf32>
    %136 = arith.addf %123, %135 : vector<10x1xf32>
    %137 = arith.addf %69, %136 : vector<10x1xf32>
    %cst_50 = arith.constant 1.000000e+00 : f32
    %138 = vector.broadcast %cst_50 : f32 to vector<10x1xf32>
    %139 = arith.addf %137, %138 : vector<10x1xf32>
    %140 = math.log %139 : vector<10x1xf32>
    %cst_51 = arith.constant 0.000000e+00 : f32
    %141 = vector.broadcast %cst_51 : f32 to vector<10x1xf32>
    %142 = arith.select %7, %140, %141 : vector<10x1xi1>, vector<10x1xf32>
    %143 = vector.shape_cast %142 : vector<10x1xf32> to vector<1x10x1xf32>
    %cst_52 = arith.constant dense<0.000000e+00> : vector<1xf32>
    %144 = vector.multi_reduction <add>, %143, %cst_52 [1, 2] : vector<1x10x1xf32> to vector<1xf32>
    %145 = vector.shape_cast %144 : vector<1xf32> to vector<1x1x1xf32>
    %146 = vector.extract %145[0, 0, 0] : f32 from vector<1x1x1xf32>
    %cst_53 = arith.constant 0.000000e+00 : f32
    %147 = vector.broadcast %cst_53 : f32 to vector<10x1xf32>
    %148 = arith.select %7, %61, %147 : vector<10x1xi1>, vector<10x1xf32>
    %149 = vector.shape_cast %148 : vector<10x1xf32> to vector<1x10x1xf32>
    %cst_54 = arith.constant dense<0.000000e+00> : vector<1xf32>
    %150 = vector.multi_reduction <add>, %149, %cst_54 [1, 2] : vector<1x10x1xf32> to vector<1xf32>
    %151 = vector.shape_cast %150 : vector<1xf32> to vector<1x1x1xf32>
    %152 = vector.extract %151[0, 0, 0] : f32 from vector<1x1x1xf32>
    %cst_55 = arith.constant 0.000000e+00 : f32
    %153 = vector.broadcast %cst_55 : f32 to vector<10x1xf32>
    %154 = arith.select %7, %128, %153 : vector<10x1xi1>, vector<10x1xf32>
    %155 = vector.shape_cast %154 : vector<10x1xf32> to vector<1x10x1xf32>
    %cst_56 = arith.constant dense<0.000000e+00> : vector<1xf32>
    %156 = vector.multi_reduction <add>, %155, %cst_56 [1, 2] : vector<1x10x1xf32> to vector<1xf32>
    %157 = vector.shape_cast %156 : vector<1xf32> to vector<1x1x1xf32>
    %158 = vector.extract %157[0, 0, 0] : f32 from vector<1x1x1xf32>
    %159 = tpu.iota {dimensions = array<i32: 0>} : vector<8x128xi32>
    %c0_i32 = arith.constant 0 : i32
    %160 = vector.broadcast %c0_i32 : i32 to vector<8x128xi32>
    %161 = arith.cmpi eq, %159, %160 : vector<8x128xi32>
    %cst_57 = arith.constant 0.000000e+00 : f32
    %162 = vector.broadcast %146 : f32 to vector<8x128xf32>
    %163 = vector.broadcast %cst_57 : f32 to vector<8x128xf32>
    %164 = arith.select %161, %162, %163 : vector<8x128xi1>, vector<8x128xf32>
    %c1_i32 = arith.constant 1 : i32
    %165 = vector.broadcast %c1_i32 : i32 to vector<8x128xi32>
    %166 = arith.cmpi eq, %159, %165 : vector<8x128xi32>
    %167 = vector.broadcast %28 : f32 to vector<8x128xf32>
    %168 = arith.select %166, %167, %164 : vector<8x128xi1>, vector<8x128xf32>
    %c2_i32 = arith.constant 2 : i32
    %169 = vector.broadcast %c2_i32 : i32 to vector<8x128xi32>
    %170 = arith.cmpi eq, %159, %169 : vector<8x128xi32>
    %171 = vector.broadcast %19 : f32 to vector<8x128xf32>
    %172 = arith.select %170, %171, %168 : vector<8x128xi1>, vector<8x128xf32>
    %c3_i32 = arith.constant 3 : i32
    %173 = vector.broadcast %c3_i32 : i32 to vector<8x128xi32>
    %174 = arith.cmpi eq, %159, %173 : vector<8x128xi32>
    %175 = vector.broadcast %152 : f32 to vector<8x128xf32>
    %176 = arith.select %174, %175, %172 : vector<8x128xi1>, vector<8x128xf32>
    %c4_i32 = arith.constant 4 : i32
    %177 = vector.broadcast %c4_i32 : i32 to vector<8x128xi32>
    %178 = arith.cmpi eq, %159, %177 : vector<8x128xi32>
    %179 = vector.broadcast %158 : f32 to vector<8x128xf32>
    %180 = arith.select %178, %179, %176 : vector<8x128xi1>, vector<8x128xf32>
    %c0_58 = arith.constant 0 : index
    %c0_59 = arith.constant 0 : index
    %c0_60 = arith.constant 0 : index
    %181 = vector.load %arg5[%c0_58, %c0_59, %c0_60] : memref<1x8x128xf32, #tpu.memory_space<vmem>>, vector<1x8x128xf32>
    %182 = vector.shape_cast %181 : vector<1x8x128xf32> to vector<8x128xf32>
    %183 = vector.shape_cast %180 : vector<8x128xf32> to vector<1x8x128xf32>
    tpu.vector_store %arg5[%c0_58, %c0_59, %c0_60], %183 {strides = array<i32>} : memref<1x8x128xf32, #tpu.memory_space<vmem>>, vector<1x8x128xf32>,
    return
  }
  func.func @transform_0(%arg0: i32) -> (i32, i32) {
    %c0_i32 = arith.constant 0 : i32
    %c0_i32_0 = arith.constant 0 : i32
    return %arg0, %c0_i32 : i32, i32
  }
  func.func @transform_1(%arg0: i32) -> (i32, i32) {
    %c0_i32 = arith.constant 0 : i32
    %c0_i32_0 = arith.constant 0 : i32
    return %arg0, %c0_i32 : i32, i32
  }
  func.func @transform_2(%arg0: i32) -> (i32, i32) {
    %c0_i32 = arith.constant 0 : i32
    %c0_i32_0 = arith.constant 0 : i32
    return %arg0, %c0_i32 : i32, i32
  }
  func.func @transform_3(%arg0: i32) -> (i32, i32) {
    %c0_i32 = arith.constant 0 : i32
    %c0_i32_0 = arith.constant 0 : i32
    return %arg0, %c0_i32 : i32, i32
  }
  func.func @transform_4(%arg0: i32) -> (i32, i32, i32) {
    %c0_i32 = arith.constant 0 : i32
    %c0_i32_0 = arith.constant 0 : i32
    %c0_i32_1 = arith.constant 0 : i32
    return %arg0, %c0_i32, %c0_i32_0 : i32, i32, i32
  }
}

</mosaic_0001>

<llo_original>
// kernel: tpu_custom_call.1
$region0: #{tpu_custom_call.1}
  #allocation0 [shape = 'u32[]', space=smem, size = 0x4, offset = 0x4, fixed_abs, tag = 'smem constant byte address 0x4 - core index']
  #allocation1 [shape = 'u32[144,128]{1,0:T(1,128)}', space=vmem, size = 0x12000, scoped, tag = 'internal scratch']
  %s0 = inlined_call_operand.hbm [shape: f32[10,128], index: 0, kind: input, shape index: {}]
  %s1 = inlined_call_operand.hbm [shape: f32[10,128], index: 1, kind: input, shape index: {}]
  %s2 = inlined_call_operand.hbm [shape: f32[10,384], index: 2, kind: input, shape index: {}]
  %s3 = inlined_call_operand.hbm [shape: f32[10,640], index: 3, kind: input, shape index: {}]
  %s4 = inlined_call_operand.hbm [shape: f32[1,8,128], index: 4, kind: output, shape index: {}]
  %s5 = sld [smem:[#allocation0]]
  $region42: #{tpu_custom_call.1} parent=0
    _
  %s7 = ssub.s32 1, %s5
  %s8 = scalar_select 0, %s7, %s5
  $region1: #{tpu_custom_call.1} parent=0
    #allocation2 [shape = 'u8[8192]{0}', space=vmem, size = 0x2000, scoped, tag = 'input window, operand 0, single buffered']
    #allocation3 [shape = 's32[1]{0}', space=sflag, size = 0x4, scoped, tag = 'scoped memory for tpu_custom_call.1']
    #allocation4 [shape = 's32[1]{0}', space=sflag, size = 0x4, scoped, tag = 'scoped memory for tpu_custom_call.1']
    #allocation5 [shape = 'u8[8192]{0}', space=vmem, size = 0x2000, scoped, tag = 'input window, operand 1, single buffered']
    #allocation6 [shape = 's32[1]{0}', space=sflag, size = 0x4, scoped, tag = 'scoped memory for tpu_custom_call.1']
    #allocation7 [shape = 'u8[24576]{0}', space=vmem, size = 0x6000, scoped, tag = 'input window, operand 2, single buffered']
    #allocation8 [shape = 'u8[40960]{0}', space=vmem, size = 0xa000, scoped, tag = 'input window, operand 3, single buffered']
    #allocation9 [shape = 's32[1]{0}', space=sflag, size = 0x4, scoped, tag = 'scoped memory for tpu_custom_call.1']
    #allocation10 [shape = 'u8[4096]{0}', space=vmem, size = 0x1000, scoped, tag = 'output window, operand 0, single buffered']
    %9 = vsyncpa [#allocation3], 0
    %10 = vsyncpa [#allocation6], 0
    %11 = vsyncpa [#allocation9], 0
    %12 = vsyncpa [#allocation4], 0
    // Predicated region
    $region2: #{tpu_custom_call.1} parent=1 // pred_check
      _
    $region3: #{tpu_custom_call.1} parent=1 // pred_check_branch
      %14 = sbr.rel (0) target = $region5
    $region4: #{tpu_custom_call.1} parent=1 // pred_region
      %s16 = ssub.s32 256, 256
      %17 = vsyncadd [#allocation3], %s16
      %s18 = sshll.u32 [#allocation2], 4
      %s19 = int_to_ptr.vmem [resolvable:$true] %s18
      %24 = dma.hbm_to_vmem [thread:$0]  %s0, 256, %s19, [#allocation3], 128, 128, 8
    $region5: #{tpu_custom_call.1} parent=1 // pred_fallthru
      _
    // Predicated region
    $region6: #{tpu_custom_call.1} parent=1 // pred_check
      _
    $region7: #{tpu_custom_call.1} parent=1 // pred_check_branch
      %26 = sbr.rel (0) target = $region9
    $region8: #{tpu_custom_call.1} parent=1 // pred_region
      %s28 = ssub.s32 256, 256
      %29 = vsyncadd [#allocation6], %s28
      %s30 = sshll.u32 [#allocation5], 4
      %s31 = int_to_ptr.vmem [resolvable:$true] %s30
      %36 = dma.hbm_to_vmem [thread:$0]  %s1, 256, %s31, [#allocation6], 128, 128, 8
    $region9: #{tpu_custom_call.1} parent=1 // pred_fallthru
      _
    // Predicated region
    $region10: #{tpu_custom_call.1} parent=1 // pred_check
      _
    $region11: #{tpu_custom_call.1} parent=1 // pred_check_branch
      %38 = sbr.rel (0) target = $region13
    $region12: #{tpu_custom_call.1} parent=1 // pred_region
      %s40 = ssub.s32 768, 768
      %41 = vsyncadd [#allocation6], %s40
      %s42 = sshll.u32 [#allocation7], 4
      %s43 = int_to_ptr.vmem [resolvable:$true] %s42
      %48 = dma.hbm_to_vmem [thread:$0]  %s2, 768, %s43, [#allocation6], 384, 384, 24
    $region13: #{tpu_custom_call.1} parent=1 // pred_fallthru
      _
    // Predicated region
    $region14: #{tpu_custom_call.1} parent=1 // pred_check
      _
    $region15: #{tpu_custom_call.1} parent=1 // pred_check_branch
      %50 = sbr.rel (0) target = $region17
    $region16: #{tpu_custom_call.1} parent=1 // pred_region
      %s52 = ssub.s32 1280, 1280
      %53 = vsyncadd [#allocation9], %s52
      %s54 = sshll.u32 [#allocation8], 4
      %s55 = int_to_ptr.vmem [resolvable:$true] %s54
      %60 = dma.hbm_to_vmem [thread:$0]  %s3, 1280, %s55, [#allocation9], 640, 640, 40
    $region17: #{tpu_custom_call.1} parent=1 // pred_fallthru
      _
    // Predicated region
    $region18: #{tpu_custom_call.1} parent=1 // pred_check
      _
    $region19: #{tpu_custom_call.1} parent=1 // pred_check_branch
      %62 = sbr.rel (0) target = $region21
    $region20: #{tpu_custom_call.1} parent=1 // pred_region
      %63 = dma.done [#allocation3], 256
    $region21: #{tpu_custom_call.1} parent=1 // pred_fallthru
      _
    // Predicated region
    $region22: #{tpu_custom_call.1} parent=1 // pred_check
      _
    $region23: #{tpu_custom_call.1} parent=1 // pred_check_branch
      %65 = sbr.rel (0) target = $region25
    $region24: #{tpu_custom_call.1} parent=1 // pred_region
      %66 = dma.done [#allocation6], 256
    $region25: #{tpu_custom_call.1} parent=1 // pred_fallthru
      _
    // Predicated region
    $region26: #{tpu_custom_call.1} parent=1 // pred_check
      _
    $region27: #{tpu_custom_call.1} parent=1 // pred_check_branch
      %68 = sbr.rel (0) target = $region29
    $region28: #{tpu_custom_call.1} parent=1 // pred_region
      %69 = dma.done [#allocation6], 768
    $region29: #{tpu_custom_call.1} parent=1 // pred_fallthru
      _
    // Predicated region
    $region30: #{tpu_custom_call.1} parent=1 // pred_check
      _
    $region31: #{tpu_custom_call.1} parent=1 // pred_check_branch
      %71 = sbr.rel (0) target = $region33
    $region32: #{tpu_custom_call.1} parent=1 // pred_region
      %72 = dma.done [#allocation9], 1280
    $region33: #{tpu_custom_call.1} parent=1 // pred_fallthru
      _
    %v73 = vld [vmem:[#allocation2] sm:$0xff]
    %v74 = vld [vmem:[#allocation2 + $0x8] sm:$0x3]
    %v75 = vld [vmem:[#allocation5] sm:$0xff]
    %v76 = vld [vmem:[#allocation5 + $0x8] sm:$0x3]
    %v77 = vlaneseq
    %v78 = vshrl.u32 %v77, 7
    %v79 = vadd.s32 %v78, 8
    %s80 = smul.u32 0, 10
    %v81 = vstv %s80
    %v82 = vadd.s32 %v78, %v81
    %v83 = vadd.s32 %v79, %v81
    %vm84 = vcmp.lt.s32.totalorder %v82, 10
    %vm85 = vcmp.lt.s32.totalorder %v83, 10
    %v86 = vmul.f32 %v75, %v73
    %v87 = vmul.f32 %v76, %v74
    %88 = vadd.xlane.f32.xlu0 %v86
    %v89 = vpop.xlane.xlu0 %88
    %vm90 = vcmask 1041408
    %v91 = vsel %vm90, %v87, 0.0
    %92 = vadd.xlane.f32.xlu0 %v91
    %v93 = vpop.xlane.xlu0 %92
    %v94 = vmul.f32 %v73, %v73
    %v95 = vmul.f32 %v74, %v74
    %96 = vadd.xlane.f32.xlu0 %v94
    %v97 = vpop.xlane.xlu0 %96
    %v98 = vsel %vm90, %v95, 0.0
    %99 = vadd.xlane.f32.xlu0 %v98
    %v100 = vpop.xlane.xlu0 %99
    %v101 = vsel %vm84, %v97, 0.0
    %v102 = vsel %vm85, %v100, 0.0
    %vm103 = vcmask 7168
    %v104 = vsel %vm103, %v101, 0.0
    %vm105 = vcmask 1024
    %v106 = vsel %vm105, %v102, 0.0
    %v107 = vadd.f32 %v104, %v106
    %108 = vadd.xlane.f32.xlu0 %v107
    %v109 = vpop.xlane.xlu0 %108
    %v110 = vrot.slane %v109, 4
    %v111 = vadd.f32 %v109, %v110
    %v112 = vrot.slane %v111, 2
    %v113 = vadd.f32 %v111, %v112
    %v114 = vrot.slane %v113, 1
    %v115 = vadd.f32 %v113, %v114
    %s116 = vtos %v115
    %v117 = vmul.f32 %v75, %v75
    %v118 = vmul.f32 %v76, %v76
    %119 = vadd.xlane.f32.xlu0 %v117
    %v120 = vpop.xlane.xlu0 %119
    %v121 = vsel %vm90, %v118, 0.0
    %122 = vadd.xlane.f32.xlu0 %v121
    %v123 = vpop.xlane.xlu0 %122
    %v124 = vsel %vm84, %v120, 0.0
    %v125 = vsel %vm85, %v123, 0.0
    %v126 = vsel %vm103, %v124, 0.0
    %v127 = vsel %vm105, %v125, 0.0
    %v128 = vadd.f32 %v126, %v127
    %129 = vadd.xlane.f32.xlu0 %v128
    %v130 = vpop.xlane.xlu0 %129
    %v131 = vrot.slane %v130, 4
    %v132 = vadd.f32 %v130, %v131
    %v133 = vrot.slane %v132, 2
    %v134 = vadd.f32 %v132, %v133
    %v135 = vrot.slane %v134, 1
    %v136 = vadd.f32 %v134, %v135
    %s137 = vtos %v136
    %v138 = vld [vmem:[#allocation7] sm:$0xff]
    %v139 = vld [vmem:[#allocation7 + $0x18] sm:$0x3]
    %v140 = vmul.f32 %v138, %v138
    %v141 = vmul.f32 %v139, %v139
    %142 = vadd.xlane.f32.xlu0 %v140
    %v143 = vpop.xlane.xlu0 %142
    %v144 = vsel %vm90, %v141, 0.0
    %145 = vadd.xlane.f32.xlu0 %v144
    %v146 = vpop.xlane.xlu0 %145
    %v147 = vadd.f32 %v143, 0.0
    %v148 = vadd.f32 %v146, 0.0
    %v149 = vmul.f32 %v138, %v73
    %v150 = vmul.f32 %v139, %v74
    %151 = vadd.xlane.f32.xlu0 %v149
    %v152 = vpop.xlane.xlu0 %151
    %v153 = vsel %vm90, %v150, 0.0
    %154 = vadd.xlane.f32.xlu0 %v153
    %v155 = vpop.xlane.xlu0 %154
    %v156 = vsub.f32 %v152, %v89
    %v157 = vsub.f32 %v155, %v93
    %v158 = vmul.f32 %v156, 2.0
    %v159 = vmul.f32 %v157, 2.0
    %v160 = vmul.f32 %v158, 1.442695
    %v161 = vpow.pop %v160
    %v162 = vmul.f32 %v159, 1.442695
    %v163 = vpow.pop %v162
    %v164 = vadd.f32 %v161, 0.0
    %v165 = vadd.f32 %v163, 0.0
    %v166 = vld [vmem:[#allocation7 + $0x8] sm:$0xff]
    %v167 = vld [vmem:[#allocation7 + $0x20] sm:$0x3]
    %v168 = vmul.f32 %v166, %v166
    %v169 = vmul.f32 %v167, %v167
    %170 = vadd.xlane.f32.xlu0 %v168
    %v171 = vpop.xlane.xlu0 %170
    %v172 = vsel %vm90, %v169, 0.0
    %173 = vadd.xlane.f32.xlu0 %v172
    %v174 = vpop.xlane.xlu0 %173
    %v175 = vadd.f32 %v147, %v171
    %v176 = vadd.f32 %v148, %v174
    %v177 = vmul.f32 %v166, %v73
    %v178 = vmul.f32 %v167, %v74
    %179 = vadd.xlane.f32.xlu0 %v177
    %v180 = vpop.xlane.xlu0 %179
    %v181 = vsel %vm90, %v178, 0.0
    %182 = vadd.xlane.f32.xlu0 %v181
    %v183 = vpop.xlane.xlu0 %182
    %v184 = vsub.f32 %v180, %v89
    %v185 = vsub.f32 %v183, %v93
    %v186 = vmul.f32 %v184, 2.0
    %v187 = vmul.f32 %v185, 2.0
    %v188 = vmul.f32 %v186, 1.442695
    %v189 = vpow.pop %v188
    %v190 = vmul.f32 %v187, 1.442695
    %v191 = vpow.pop %v190
    %v192 = vadd.f32 %v164, %v189
    %v193 = vadd.f32 %v165, %v191
    %v194 = vld [vmem:[#allocation7 + $0x10] sm:$0xff]
    %v195 = vld [vmem:[#allocation7 + $0x28] sm:$0x3]
    %v196 = vmul.f32 %v194, %v194
    %v197 = vmul.f32 %v195, %v195
    %198 = vadd.xlane.f32.xlu0 %v196
    %v199 = vpop.xlane.xlu0 %198
    %v200 = vsel %vm90, %v197, 0.0
    %201 = vadd.xlane.f32.xlu0 %v200
    %v202 = vpop.xlane.xlu0 %201
    %v203 = vadd.f32 %v175, %v199
    %v204 = vadd.f32 %v176, %v202
    %v205 = vmul.f32 %v194, %v73
    %v206 = vmul.f32 %v195, %v74
    %207 = vadd.xlane.f32.xlu0 %v205
    %v208 = vpop.xlane.xlu0 %207
    %v209 = vsel %vm90, %v206, 0.0
    %210 = vadd.xlane.f32.xlu0 %v209
    %v211 = vpop.xlane.xlu0 %210
    %v212 = vsub.f32 %v208, %v89
    %v213 = vsub.f32 %v211, %v93
    %v214 = vmul.f32 %v212, 2.0
    %v215 = vmul.f32 %v213, 2.0
    %v216 = vmul.f32 %v214, 1.442695
    %v217 = vpow.pop %v216
    %v218 = vmul.f32 %v215, 1.442695
    %v219 = vpow.pop %v218
    %v220 = vadd.f32 %v192, %v217
    %v221 = vadd.f32 %v193, %v219
    %v222 = vld [vmem:[#allocation8] sm:$0xff]
    %v223 = vld [vmem:[#allocation8 + $0x28] sm:$0x3]
    %v224 = vmul.f32 %v222, %v222
    %v225 = vmul.f32 %v223, %v223
    %226 = vadd.xlane.f32.xlu0 %v224
    %v227 = vpop.xlane.xlu0 %226
    %v228 = vsel %vm90, %v225, 0.0
    %229 = vadd.xlane.f32.xlu0 %v228
    %v230 = vpop.xlane.xlu0 %229
    %v231 = vadd.f32 %v227, 0.0
    %v232 = vadd.f32 %v230, 0.0
    %v233 = vmul.f32 %v222, %v73
    %v234 = vmul.f32 %v223, %v74
    %235 = vadd.xlane.f32.xlu0 %v233
    %v236 = vpop.xlane.xlu0 %235
    %v237 = vsel %vm90, %v234, 0.0
    %238 = vadd.xlane.f32.xlu0 %v237
    %v239 = vpop.xlane.xlu0 %238
    %v240 = vsub.f32 %v236, %v89
    %v241 = vsub.f32 %v239, %v93
    %v242 = vmul.f32 %v240, 2.0
    %v243 = vmul.f32 %v241, 2.0
    %v244 = vmul.f32 %v242, 1.442695
    %v245 = vpow.pop %v244
    %v246 = vmul.f32 %v243, 1.442695
    %v247 = vpow.pop %v246
    %v248 = vadd.f32 %v245, 0.0
    %v249 = vadd.f32 %v247, 0.0
    %v250 = vld [vmem:[#allocation8 + $0x8] sm:$0xff]
    %v251 = vld [vmem:[#allocation8 + $0x30] sm:$0x3]
    %v252 = vmul.f32 %v250, %v250
    %v253 = vmul.f32 %v251, %v251
    %254 = vadd.xlane.f32.xlu0 %v252
    %v255 = vpop.xlane.xlu0 %254
    %v256 = vsel %vm90, %v253, 0.0
    %257 = vadd.xlane.f32.xlu0 %v256
    %v258 = vpop.xlane.xlu0 %257
    %v259 = vadd.f32 %v231, %v255
    %v260 = vadd.f32 %v232, %v258
    %v261 = vmul.f32 %v250, %v73
    %v262 = vmul.f32 %v251, %v74
    %263 = vadd.xlane.f32.xlu0 %v261
    %v264 = vpop.xlane.xlu0 %263
    %v265 = vsel %vm90, %v262, 0.0
    %266 = vadd.xlane.f32.xlu0 %v265
    %v267 = vpop.xlane.xlu0 %266
    %v268 = vsub.f32 %v264, %v89
    %v269 = vsub.f32 %v267, %v93
    %v270 = vmul.f32 %v268, 2.0
    %v271 = vmul.f32 %v269, 2.0
    %v272 = vmul.f32 %v270, 1.442695
    %v273 = vpow.pop %v272
    %v274 = vmul.f32 %v271, 1.442695
    %v275 = vpow.pop %v274
    %v276 = vadd.f32 %v248, %v273
    %v277 = vadd.f32 %v249, %v275
    %v278 = vld [vmem:[#allocation8 + $0x10] sm:$0xff]
    %v279 = vld [vmem:[#allocation8 + $0x38] sm:$0x3]
    %v280 = vmul.f32 %v278, %v278
    %v281 = vmul.f32 %v279, %v279
    %282 = vadd.xlane.f32.xlu0 %v280
    %v283 = vpop.xlane.xlu0 %282
    %v284 = vsel %vm90, %v281, 0.0
    %285 = vadd.xlane.f32.xlu0 %v284
    %v286 = vpop.xlane.xlu0 %285
    %v287 = vadd.f32 %v259, %v283
    %v288 = vadd.f32 %v260, %v286
    %v289 = vmul.f32 %v278, %v73
    %v290 = vmul.f32 %v279, %v74
    %291 = vadd.xlane.f32.xlu0 %v289
    %v292 = vpop.xlane.xlu0 %291
    %v293 = vsel %vm90, %v290, 0.0
    %294 = vadd.xlane.f32.xlu0 %v293
    %v295 = vpop.xlane.xlu0 %294
    %v296 = vsub.f32 %v292, %v89
    %v297 = vsub.f32 %v295, %v93
    %v298 = vmul.f32 %v296, 2.0
    %v299 = vmul.f32 %v297, 2.0
    %v300 = vmul.f32 %v298, 1.442695
    %v301 = vpow.pop %v300
    %v302 = vmul.f32 %v299, 1.442695
    %v303 = vpow.pop %v302
    %v304 = vadd.f32 %v276, %v301
    %v305 = vadd.f32 %v277, %v303
    %v306 = vld [vmem:[#allocation8 + $0x18] sm:$0xff]
    %v307 = vld [vmem:[#allocation8 + $0x40] sm:$0x3]
    %v308 = vmul.f32 %v306, %v306
    %v309 = vmul.f32 %v307, %v307
    %310 = vadd.xlane.f32.xlu0 %v308
    %v311 = vpop.xlane.xlu0 %310
    %v312 = vsel %vm90, %v309, 0.0
    %313 = vadd.xlane.f32.xlu0 %v312
    %v314 = vpop.xlane.xlu0 %313
    %v315 = vadd.f32 %v287, %v311
    %v316 = vadd.f32 %v288, %v314
    %v317 = vmul.f32 %v306, %v73
    %v318 = vmul.f32 %v307, %v74
    %319 = vadd.xlane.f32.xlu0 %v317
    %v320 = vpop.xlane.xlu0 %319
    %v321 = vsel %vm90, %v318, 0.0
    %322 = vadd.xlane.f32.xlu0 %v321
    %v323 = vpop.xlane.xlu0 %322
    %v324 = vsub.f32 %v320, %v89
    %v325 = vsub.f32 %v323, %v93
    %v326 = vmul.f32 %v324, 2.0
    %v327 = vmul.f32 %v325, 2.0
    %v328 = vmul.f32 %v326, 1.442695
    %v329 = vpow.pop %v328
    %v330 = vmul.f32 %v327, 1.442695
    %v331 = vpow.pop %v330
    %v332 = vadd.f32 %v304, %v329
    %v333 = vadd.f32 %v305, %v331
    %v334 = vld [vmem:[#allocation8 + $0x20] sm:$0xff]
    %v335 = vld [vmem:[#allocation8 + $0x48] sm:$0x3]
    %v336 = vmul.f32 %v334, %v334
    %v337 = vmul.f32 %v335, %v335
    %338 = vadd.xlane.f32.xlu0 %v336
    %v339 = vpop.xlane.xlu0 %338
    %v340 = vsel %vm90, %v337, 0.0
    %341 = vadd.xlane.f32.xlu0 %v340
    %v342 = vpop.xlane.xlu0 %341
    %v343 = vadd.f32 %v315, %v339
    %v344 = vadd.f32 %v316, %v342
    %v345 = vmul.f32 %v334, %v73
    %v346 = vmul.f32 %v335, %v74
    %347 = vadd.xlane.f32.xlu0 %v345
    %v348 = vpop.xlane.xlu0 %347
    %v349 = vsel %vm90, %v346, 0.0
    %350 = vadd.xlane.f32.xlu0 %v349
    %v351 = vpop.xlane.xlu0 %350
    %v352 = vsub.f32 %v348, %v89
    %v353 = vsub.f32 %v351, %v93
    %v354 = vmul.f32 %v352, 2.0
    %v355 = vmul.f32 %v353, 2.0
    %v356 = vmul.f32 %v354, 1.442695
    %v357 = vpow.pop %v356
    %v358 = vmul.f32 %v355, 1.442695
    %v359 = vpow.pop %v358
    %v360 = vadd.f32 %v332, %v357
    %v361 = vadd.f32 %v333, %v359
    %v362 = vadd.f32 %v220, %v360
    %v363 = vadd.f32 %v221, %v361
    %v364 = vadd.f32 %v362, 1.0
    %v365 = vadd.f32 %v363, 1.0
    %v366 = vlog2.pop %v364
    %v367 = vmul.f32 %v366, 0.6931472
    %v368 = vlog2.pop %v365
    %v369 = vmul.f32 %v368, 0.6931472
    %v370 = vsel %vm84, %v367, 0.0
    %v371 = vsel %vm85, %v369, 0.0
    %v372 = vsel %vm103, %v370, 0.0
    %v373 = vsel %vm105, %v371, 0.0
    %v374 = vadd.f32 %v372, %v373
    %375 = vadd.xlane.f32.xlu0 %v374
    %v376 = vpop.xlane.xlu0 %375
    %v377 = vrot.slane %v376, 4
    %v378 = vadd.f32 %v376, %v377
    %v379 = vrot.slane %v378, 2
    %v380 = vadd.f32 %v378, %v379
    %v381 = vrot.slane %v380, 1
    %v382 = vadd.f32 %v380, %v381
    %s383 = vtos %v382
    %v384 = vsel %vm84, %v203, 0.0
    %v385 = vsel %vm85, %v204, 0.0
    %v386 = vsel %vm103, %v384, 0.0
    %v387 = vsel %vm105, %v385, 0.0
    %v388 = vadd.f32 %v386, %v387
    %389 = vadd.xlane.f32.xlu0 %v388
    %v390 = vpop.xlane.xlu0 %389
    %v391 = vrot.slane %v390, 4
    %v392 = vadd.f32 %v390, %v391
    %v393 = vrot.slane %v392, 2
    %v394 = vadd.f32 %v392, %v393
    %v395 = vrot.slane %v394, 1
    %v396 = vadd.f32 %v394, %v395
    %s397 = vtos %v396
    %v398 = vsel %vm84, %v343, 0.0
    %v399 = vsel %vm85, %v344, 0.0
    %v400 = vsel %vm103, %v398, 0.0
    %v401 = vsel %vm105, %v399, 0.0
    %v402 = vadd.f32 %v400, %v401
    %403 = vadd.xlane.f32.xlu0 %v402
    %v404 = vpop.xlane.xlu0 %403
    %v405 = vrot.slane %v404, 4
    %v406 = vadd.f32 %v404, %v405
    %v407 = vrot.slane %v406, 2
    %v408 = vadd.f32 %v406, %v407
    %v409 = vrot.slane %v408, 1
    %v410 = vadd.f32 %v408, %v409
    %s411 = vtos %v410
    %vm412 = vcmp.eq.s32.totalorder %v78, 0
    %v413 = vstv %s383
    %v414 = vsel %vm412, %v413, 0.0
    %vm415 = vcmp.eq.s32.totalorder %v78, 1
    %v416 = vstv %s137
    %v417 = vsel %vm415, %v416, %v414
    %vm418 = vcmp.eq.s32.totalorder %v78, 2
    %v419 = vstv %s116
    %v420 = vsel %vm418, %v419, %v417
    %vm421 = vcmp.eq.s32.totalorder %v78, 3
    %v422 = vstv %s397
    %v423 = vsel %vm421, %v422, %v420
    %vm424 = vcmp.eq.s32.totalorder %v78, 4
    %v425 = vstv %s411
    %v426 = vsel %vm424, %v425, %v423
    %427 = vst [vmem:[#allocation10] sm:$0xff] %v426
    // Predicated region
    $region34: #{tpu_custom_call.1} parent=1 // pred_check
      _
    $region35: #{tpu_custom_call.1} parent=1 // pred_check_branch
      %429 = sbr.rel (0) target = $region37
    $region36: #{tpu_custom_call.1} parent=1 // pred_region
      %s431 = ssub.s32 128, 128
      %432 = vsyncadd [#allocation4], %s431
      %s434 = sshll.u32 [#allocation10], 4
      %s435 = int_to_ptr.vmem [resolvable:$true] %s434
      %437 = dma.vmem_to_hbm [thread:$0]  %s435, 128, %s4, [#allocation4]
    $region37: #{tpu_custom_call.1} parent=1 // pred_fallthru
      _
    // Predicated region
    $region38: #{tpu_custom_call.1} parent=1 // pred_check
      _
    $region39: #{tpu_custom_call.1} parent=1 // pred_check_branch
      %439 = sbr.rel (0) target = $region41
    $region40: #{tpu_custom_call.1} parent=1 // pred_region
      %440 = dma.done [#allocation4], 128
    $region41: #{tpu_custom_call.1} parent=1 // pred_fallthru
      _
    %441 = vsyncpa [#allocation3], 1
    %442 = vsyncpa [#allocation6], 1
    %443 = vsyncpa [#allocation9], 1
    %444 = vsyncpa [#allocation4], 1

</llo_original>
